<compile_context>
chip_gen: v7x
topology: tpu7x:2x2x1
jax: 0.10.0
libtpu: 0.0.40
codegen_flags: <defaults>
</compile_context>

<pallas_src>
import math

import jax
import jax.numpy as jnp
from jax.experimental import pallas as pl
from jax.experimental.pallas import tpu as pltpu

_HIDDEN = 512
_EPS = 1e-5


def _disc_kernel(x_ref, w1_ref, w2_ref, b2_ref, gamma_ref, beta_ref, w3_ref,
                 nvalid_ref, b1_ref, b3_ref, out_ref):
    # x: (B, S, D) f32 in VMEM; scalars in SMEM.
    B, S, D = x_ref.shape
    x = x_ref[...]

    # ---- li1: Linear(d, 1) as VPU multiply + cross-lane reduce (no MXU) ----
    # w1 is (1, 1, D); out1 is (B, S).
    out1 = jnp.sum(x * w1_ref[...], axis=-1) + b1_ref[0]

    # ---- B==1 path: rows >= nvalid must be exactly zero (the PyTorch zero pad)
    row_ids = jax.lax.broadcasted_iota(jnp.int32, (B, S), 0)
    out1 = jnp.where(row_ids < nvalid_ref[0], out1, 0.0)

    # ---- li2[0]: Linear(seq_len, 512) -- the one matmul worth the MXU ----
    h = jnp.dot(out1, w2_ref[...], preferred_element_type=jnp.float32)
    h = h + b2_ref[...]                                           # (B, 512)

    # ---- li2[1]: BatchNorm1d(512), training-mode batch stats, single pass ----
    inv_b = 1.0 / B
    mean = jnp.sum(h, axis=0, keepdims=True) * inv_b              # (1, 512)
    mean_sq = jnp.sum(h * h, axis=0, keepdims=True) * inv_b       # (1, 512)
    var = mean_sq - mean * mean                                   # biased var
    inv = jax.lax.rsqrt(var + _EPS) * gamma_ref[...]              # folded scale
    shift = beta_ref[...] - mean * inv                            # folded shift
    hn = h * inv + shift

    # ---- li2[2]: ReLU ----
    hn = jnp.maximum(hn, 0.0)

    # ---- li2[3]: Linear(512, 1) as VPU multiply + XLU reduce; li2[4]: Sigmoid
    logits = jnp.sum(hn * w3_ref[...], axis=-1, keepdims=True) + b3_ref[0]
    out_ref[...] = jax.nn.sigmoid(logits).astype(out_ref.dtype)   # (B, 1)


def _vmem_limit_bytes(B, S, D):
    f32 = 4
    x_b = B * S * D * f32
    w1_b = D * f32
    w2_b = S * _HIDDEN * f32
    vecs = 4 * _HIDDEN * f32                 # b2, gamma, beta, w3
    out_b = B * f32
    inter = 8 * max(B, 8) * _HIDDEN * f32    # headroom for (B,512) intermediates
    total = 2 * (x_b + w1_b + w2_b + vecs + out_b) + inter + (2 << 20)
    return int(min(total, 96 << 20))


def _run_kernel(x, nvalid, params):
    B, S, D = x.shape
    vmem = pl.BlockSpec(memory_space=pltpu.MemorySpace.VMEM)
    smem = pl.BlockSpec(memory_space=pltpu.MemorySpace.SMEM)
    return pl.pallas_call(
        _disc_kernel,
        out_shape=jax.ShapeDtypeStruct((B, 1), jnp.float32),
        in_specs=[vmem,            # x
                  vmem,            # w1 (1,1,D)
                  vmem,            # w2 (S,512)
                  vmem,            # b2 (1,512)
                  vmem,            # gamma (1,512)
                  vmem,            # beta (1,512)
                  vmem,            # w3 (1,512)
                  smem,            # nvalid (1,) i32
                  smem,            # b1 (1,) f32
                  smem],           # b3 (1,) f32
        out_specs=vmem,
        compiler_params=pltpu.CompilerParams(
            vmem_limit_bytes=_vmem_limit_bytes(B, S, D)),
    )(x,
      params["w1"], params["w2"], params["b2"],
      params["gamma"], params["beta"], params["w3"],
      nvalid, params["b1"], params["b3"])


def init_params(seq_len: int, d: int = 24, seed: int = 0):
    """Deterministic init matching PyTorch nn.Linear default U(-1/sqrt(in), 1/sqrt(in))."""
    key = jax.random.PRNGKey(seed)
    k1, k2, k3, k4, k5, k6 = jax.random.split(key, 6)
    b1_ = 1.0 / math.sqrt(d)
    b2_ = 1.0 / math.sqrt(seq_len)
    b3_ = 1.0 / math.sqrt(_HIDDEN)
    u = lambda k, shape, b: jax.random.uniform(
        k, shape, dtype=jnp.float32, minval=-b, maxval=b)
    return {
        # li1 weight as a broadcastable row (VPU path), bias as SMEM scalar.
        "w1": u(k1, (1, 1, d), b1_),
        "b1": u(k2, (1,), b1_),
        # li2[0] weight stored (in, out) so the kernel does out1 @ w2.
        "w2": u(k3, (seq_len, _HIDDEN), b2_),
        "b2": u(k4, (1, _HIDDEN), b2_),
        "gamma": jnp.ones((1, _HIDDEN), jnp.float32),
        "beta": jnp.zeros((1, _HIDDEN), jnp.float32),
        # li2[3] weight as a (1, 512) row (VPU/XLU path), bias as SMEM scalar.
        "w3": u(k5, (1, _HIDDEN), b3_),
        "b3": u(k6, (1,), b3_),
    }


def backbone_discriminator(x, params, seq_len):
    """JAX equivalent of backboneDiscriminator.forward (forward semantics only)."""
    B = x.shape[0]
    if B == 1:
        # PyTorch path: out1 is padded with a zero row, li2 runs on a 2-row
        # batch (pad participates in batch-norm stats), row 0 is returned.
        # The kernel zeroes rows >= nvalid of out1, reproducing the zero pad.
        x_eff = jnp.concatenate([x, jnp.zeros_like(x)], axis=0)
        nvalid = jnp.array([1], dtype=jnp.int32)
        out2 = _run_kernel(x_eff, nvalid, params)
        return out2[0:1]
    nvalid = jnp.array([B], dtype=jnp.int32)
    return _run_kernel(x, nvalid, params)


if __name__ == "__main__":
    B, SEQ_LEN, D = 2, 8, 24
    params = init_params(SEQ_LEN, D, seed=0)

    kx = jax.random.PRNGKey(0)
    x = jax.random.normal(kx, (B, SEQ_LEN, D), dtype=jnp.float32)

    out = backbone_discriminator(x, params, SEQ_LEN)
    out = jax.block_until_ready(out)
    assert out.shape == (B, 1), out.shape
    assert bool(jnp.all(jnp.isfinite(out)))
    assert bool(jnp.all((out >= 0.0) & (out <= 1.0)))

    # also exercise the batch==1 special path once
    out1b = jax.block_until_ready(
        backbone_discriminator(x[:1], params, SEQ_LEN))
    assert out1b.shape == (1, 1), out1b.shape
    assert bool(jnp.all(jnp.isfinite(out1b)))

    print("KERNEL_OK")
</pallas_src>

<mosaic_0001>
module attributes {stable_mosaic.version = 11 : i64} {
  func.func @_disc_kernel(%arg0: memref<2x8x24xf32, #tpu.memory_space<vmem>>, %arg1: memref<1x1x24xf32, #tpu.memory_space<vmem>>, %arg2: memref<8x512xf32, #tpu.memory_space<vmem>>, %arg3: memref<1x512xf32, #tpu.memory_space<vmem>>, %arg4: memref<1x512xf32, #tpu.memory_space<vmem>>, %arg5: memref<1x512xf32, #tpu.memory_space<vmem>>, %arg6: memref<1x512xf32, #tpu.memory_space<vmem>>, %arg7: memref<1xi32, #tpu.memory_space<smem>>, %arg8: memref<1xf32, #tpu.memory_space<smem>>, %arg9: memref<1xf32, #tpu.memory_space<smem>>, %arg10: memref<2x1xf32, #tpu.memory_space<vmem>>) attributes {dimension_semantics = [], scalar_prefetch = 0 : i64, scratch_operands = 0 : i64, tpu.core_type = #tpu.core_type<tc>} {
    %c0 = arith.constant 0 : index
    %c0_0 = arith.constant 0 : index
    %c0_1 = arith.constant 0 : index
    %0 = vector.load %arg0[%c0, %c0_0, %c0_1] : memref<2x8x24xf32, #tpu.memory_space<vmem>>, vector<2x8x24xf32>
    %c0_2 = arith.constant 0 : index
    %c0_3 = arith.constant 0 : index
    %c0_4 = arith.constant 0 : index
    %1 = vector.load %arg1[%c0_2, %c0_3, %c0_4] : memref<1x1x24xf32, #tpu.memory_space<vmem>>, vector<1x1x24xf32>
    %2 = vector.broadcast %1 : vector<1x1x24xf32> to vector<2x8x24xf32>
    %3 = arith.mulf %0, %2 : vector<2x8x24xf32>
    %cst = arith.constant dense<0.000000e+00> : vector<2x8xf32>
    %4 = vector.multi_reduction <add>, %3, %cst [2] : vector<2x8x24xf32> to vector<2x8xf32>
    %c0_5 = arith.constant 0 : index
    %5 = memref.load %arg8[%c0_5] : memref<1xf32, #tpu.memory_space<smem>>
    %6 = vector.broadcast %5 : f32 to vector<2x8xf32>
    %7 = arith.addf %4, %6 : vector<2x8xf32>
    %8 = tpu.iota {dimensions = array<i32: 0>} : vector<2x8xi32>
    %c0_6 = arith.constant 0 : index
    %9 = memref.load %arg7[%c0_6] : memref<1xi32, #tpu.memory_space<smem>>
    %10 = vector.broadcast %9 : i32 to vector<2x8xi32>
    %11 = arith.cmpi slt, %8, %10 : vector<2x8xi32>
    %cst_7 = arith.constant 0.000000e+00 : f32
    %12 = vector.broadcast %cst_7 : f32 to vector<2x8xf32>
    %13 = arith.select %11, %7, %12 : vector<2x8xi1>, vector<2x8xf32>
    %c0_8 = arith.constant 0 : index
    %c0_9 = arith.constant 0 : index
    %14 = vector.load %arg2[%c0_8, %c0_9] : memref<8x512xf32, #tpu.memory_space<vmem>>, vector<8x512xf32>
    %cst_10 = arith.constant dense<0.000000e+00> : vector<2x512xf32>
    %15 = tpu.matmul %13, %14, %cst_10 {dimension_numbers = #tpu.dot_dimension_numbers<[1], [0], [0], [1], [0, 0, 1, 1], [], []>} : vector<2x8xf32>, vector<8x512xf32>, vector<2x512xf32> -> vector<2x512xf32>
    %c0_11 = arith.constant 0 : index
    %c0_12 = arith.constant 0 : index
    %16 = vector.load %arg3[%c0_11, %c0_12] : memref<1x512xf32, #tpu.memory_space<vmem>>, vector<1x512xf32>
    %17 = vector.broadcast %16 : vector<1x512xf32> to vector<2x512xf32>
    %18 = arith.addf %15, %17 : vector<2x512xf32>
    %cst_13 = arith.constant dense<0.000000e+00> : vector<512xf32>
    %19 = vector.multi_reduction <add>, %18, %cst_13 [0] : vector<2x512xf32> to vector<512xf32>
    %20 = vector.shape_cast %19 : vector<512xf32> to vector<1x512xf32>
    %cst_14 = arith.constant 5.000000e-01 : f32
    %21 = vector.broadcast %cst_14 : f32 to vector<1x512xf32>
    %22 = arith.mulf %20, %21 : vector<1x512xf32>
    %23 = arith.mulf %18, %18 : vector<2x512xf32>
    %cst_15 = arith.constant dense<0.000000e+00> : vector<512xf32>
    %24 = vector.multi_reduction <add>, %23, %cst_15 [0] : vector<2x512xf32> to vector<512xf32>
    %25 = vector.shape_cast %24 : vector<512xf32> to vector<1x512xf32>
    %cst_16 = arith.constant 5.000000e-01 : f32
    %26 = vector.broadcast %cst_16 : f32 to vector<1x512xf32>
    %27 = arith.mulf %25, %26 : vector<1x512xf32>
    %28 = arith.mulf %22, %22 : vector<1x512xf32>
    %29 = arith.subf %27, %28 : vector<1x512xf32>
    %cst_17 = arith.constant 9.99999974E-6 : f32
    %30 = vector.broadcast %cst_17 : f32 to vector<1x512xf32>
    %31 = arith.addf %29, %30 : vector<1x512xf32>
    %32 = math.rsqrt %31 : vector<1x512xf32>
    %c0_18 = arith.constant 0 : index
    %c0_19 = arith.constant 0 : index
    %33 = vector.load %arg4[%c0_18, %c0_19] : memref<1x512xf32, #tpu.memory_space<vmem>>, vector<1x512xf32>
    %34 = arith.mulf %32, %33 : vector<1x512xf32>
    %c0_20 = arith.constant 0 : index
    %c0_21 = arith.constant 0 : index
    %35 = vector.load %arg5[%c0_20, %c0_21] : memref<1x512xf32, #tpu.memory_space<vmem>>, vector<1x512xf32>
    %36 = arith.mulf %22, %34 : vector<1x512xf32>
    %37 = arith.subf %35, %36 : vector<1x512xf32>
    %38 = vector.broadcast %34 : vector<1x512xf32> to vector<2x512xf32>
    %39 = arith.mulf %18, %38 : vector<2x512xf32>
    %40 = vector.broadcast %37 : vector<1x512xf32> to vector<2x512xf32>
    %41 = arith.addf %39, %40 : vector<2x512xf32>
    %cst_22 = arith.constant 0.000000e+00 : f32
    %42 = vector.broadcast %cst_22 : f32 to vector<2x512xf32>
    %43 = arith.maximumf %41, %42 : vector<2x512xf32>
    %c0_23 = arith.constant 0 : index
    %c0_24 = arith.constant 0 : index
    %44 = vector.load %arg6[%c0_23, %c0_24] : memref<1x512xf32, #tpu.memory_space<vmem>>, vector<1x512xf32>
    %45 = vector.broadcast %44 : vector<1x512xf32> to vector<2x512xf32>
    %46 = arith.mulf %43, %45 : vector<2x512xf32>
    %cst_25 = arith.constant dense<0.000000e+00> : vector<2xf32>
    %47 = vector.multi_reduction <add>, %46, %cst_25 [1] : vector<2x512xf32> to vector<2xf32>
    %48 = vector.shape_cast %47 : vector<2xf32> to vector<2x1xf32>
    %c0_26 = arith.constant 0 : index
    %49 = memref.load %arg9[%c0_26] : memref<1xf32, #tpu.memory_space<smem>>
    %50 = vector.broadcast %49 : f32 to vector<2x1xf32>
    %51 = arith.addf %48, %50 : vector<2x1xf32>
    %52 = arith.negf %51 : vector<2x1xf32>
    %53 = math.exp %52 : vector<2x1xf32>
    %cst_27 = arith.constant 1.000000e+00 : f32
    %54 = vector.broadcast %cst_27 : f32 to vector<2x1xf32>
    %55 = arith.addf %54, %53 : vector<2x1xf32>
    %56 = arith.divf %54, %55 : vector<2x1xf32>
    %c0_28 = arith.constant 0 : index
    %c0_29 = arith.constant 0 : index
    %57 = vector.load %arg10[%c0_28, %c0_29] : memref<2x1xf32, #tpu.memory_space<vmem>>, vector<2x1xf32>
    tpu.vector_store %arg10[%c0_28, %c0_29], %56 {strides = array<i32>} : memref<2x1xf32, #tpu.memory_space<vmem>>, vector<2x1xf32>,
    return
  }
}

</mosaic_0001>

<llo_original>
// kernel: tpu_custom_call.1
$region0: #{tpu_custom_call.1}
  #allocation0 [shape = 'u32[]', space=smem, size = 0x4, offset = 0x4, fixed_abs, tag = 'smem constant byte address 0x4 - core index']
  #allocation1 [shape = 'u32[144,128]{1,0:T(1,128)}', space=vmem, size = 0x12000, scoped, tag = 'internal scratch']
  #allocation2 [shape = 's32[1]{0:T(128)S(6)}', space=smem, size = 0x200, scoped, tag = 'scoped memory for tpu_custom_call.1']
  #allocation3 [shape = 'f32[1]{0:T(128)S(6)}', space=smem, size = 0x200, scoped, tag = 'scoped memory for tpu_custom_call.1']
  #allocation4 [shape = 'f32[1]{0:T(128)S(6)}', space=smem, size = 0x200, scoped, tag = 'scoped memory for tpu_custom_call.1']
  %s0 = inlined_call_operand.hbm [shape: f32[2,8,24], index: 0, kind: input, shape index: {}]
  %s1 = inlined_call_operand.vmem [shape: f32[1,1,24], index: 1, kind: input, shape index: {}]
  %s2 = inlined_call_operand.hbm [shape: f32[8,512], index: 2, kind: input, shape index: {}]
  %s3 = inlined_call_operand.vmem [shape: f32[1,512], index: 3, kind: input, shape index: {}]
  %s4 = inlined_call_operand.vmem [shape: f32[1,512], index: 4, kind: input, shape index: {}]
  %s5 = inlined_call_operand.vmem [shape: f32[1,512], index: 5, kind: input, shape index: {}]
  %s6 = inlined_call_operand.vmem [shape: f32[1,512], index: 6, kind: input, shape index: {}]
  %s7 = inlined_call_operand.<no memory space> [shape: s32[1], index: 7, kind: input, shape index: {}]
  %s8 = inlined_call_operand.<no memory space> [shape: f32[1], index: 8, kind: input, shape index: {}]
  %s9 = inlined_call_operand.<no memory space> [shape: f32[1], index: 9, kind: input, shape index: {}]
  %s10 = inlined_call_operand.vmem [shape: f32[2,1], index: 10, kind: output, shape index: {}]
  %s11 = sld [smem:[#allocation0]]
  $region58: #{tpu_custom_call.1} parent=0
    _
  %s13 = ssub.s32 1, %s11
  %s14 = scalar_select 0, %s13, %s11
  %15 = sst [smem:[#allocation2]] %s7
  %16 = sst [smem:[#allocation3]] %s8
  %17 = sst [smem:[#allocation4]] %s9
  $region1: #{tpu_custom_call.1} parent=0
    #allocation5 [shape = 'u8[8192]{0}', space=vmem, size = 0x2000, scoped, tag = 'input window, operand 0, single buffered']
    #allocation6 [shape = 's32[1]{0}', space=sflag, size = 0x4, scoped, tag = 'scoped memory for tpu_custom_call.1']
    #allocation7 [shape = 'u8[16384]{0}', space=vmem, size = 0x4000, scoped, tag = 'input window, operand 2, single buffered']
    #allocation8 [shape = 's32[1]{0}', space=sflag, size = 0x4, scoped, tag = 'scoped memory for tpu_custom_call.1']
    %18 = vsyncpa [#allocation6], 0
    %19 = vsyncpa [#allocation8], 0
    // Predicated region
    $region2: #{tpu_custom_call.1} parent=1 // pred_check
      _
    $region3: #{tpu_custom_call.1} parent=1 // pred_check_branch
      %21 = sbr.rel (0) target = $region5
    $region4: #{tpu_custom_call.1} parent=1 // pred_region
      %s23 = ssub.s32 256, 256
      %24 = vsyncadd [#allocation6], %s23
      %s25 = sshll.u32 [#allocation5], 4
      %s26 = int_to_ptr.vmem [resolvable:$true] %s25
      %31 = dma.hbm_to_vmem [thread:$0]  %s0, 256, %s26, [#allocation6], 128, 128, 8
    $region5: #{tpu_custom_call.1} parent=1 // pred_fallthru
      _
    // Predicated region
    $region6: #{tpu_custom_call.1} parent=1 // pred_check
      _
    $region7: #{tpu_custom_call.1} parent=1 // pred_check_branch
      %33 = sbr.rel (0) target = $region9
    $region8: #{tpu_custom_call.1} parent=1 // pred_region
      _
    $region9: #{tpu_custom_call.1} parent=1 // pred_fallthru
      _
    // Predicated region
    $region10: #{tpu_custom_call.1} parent=1 // pred_check
      _
    $region11: #{tpu_custom_call.1} parent=1 // pred_check_branch
      %35 = sbr.rel (0) target = $region13
    $region12: #{tpu_custom_call.1} parent=1 // pred_region
      %s37 = ssub.s32 512, 512
      %38 = vsyncadd [#allocation8], %s37
      %s40 = sshll.u32 [#allocation7], 4
      %s41 = int_to_ptr.vmem [resolvable:$true] %s40
      %43 = dma.hbm_to_vmem [thread:$0]  %s2, 512, %s41, [#allocation8]
    $region13: #{tpu_custom_call.1} parent=1 // pred_fallthru
      _
    // Predicated region
    $region14: #{tpu_custom_call.1} parent=1 // pred_check
      _
    $region15: #{tpu_custom_call.1} parent=1 // pred_check_branch
      %45 = sbr.rel (0) target = $region17
    $region16: #{tpu_custom_call.1} parent=1 // pred_region
      _
    $region17: #{tpu_custom_call.1} parent=1 // pred_fallthru
      _
    // Predicated region
    $region18: #{tpu_custom_call.1} parent=1 // pred_check
      _
    $region19: #{tpu_custom_call.1} parent=1 // pred_check_branch
      %47 = sbr.rel (0) target = $region21
    $region20: #{tpu_custom_call.1} parent=1 // pred_region
      _
    $region21: #{tpu_custom_call.1} parent=1 // pred_fallthru
      _
    // Predicated region
    $region22: #{tpu_custom_call.1} parent=1 // pred_check
      _
    $region23: #{tpu_custom_call.1} parent=1 // pred_check_branch
      %49 = sbr.rel (0) target = $region25
    $region24: #{tpu_custom_call.1} parent=1 // pred_region
      _
    $region25: #{tpu_custom_call.1} parent=1 // pred_fallthru
      _
    // Predicated region
    $region26: #{tpu_custom_call.1} parent=1 // pred_check
      _
    $region27: #{tpu_custom_call.1} parent=1 // pred_check_branch
      %51 = sbr.rel (0) target = $region29
    $region28: #{tpu_custom_call.1} parent=1 // pred_region
      _
    $region29: #{tpu_custom_call.1} parent=1 // pred_fallthru
      _
    // Predicated region
    $region30: #{tpu_custom_call.1} parent=1 // pred_check
      _
    $region31: #{tpu_custom_call.1} parent=1 // pred_check_branch
      %53 = sbr.rel (0) target = $region33
    $region32: #{tpu_custom_call.1} parent=1 // pred_region
      _
    $region33: #{tpu_custom_call.1} parent=1 // pred_fallthru
      _
    // Predicated region
    $region34: #{tpu_custom_call.1} parent=1 // pred_check
      _
    $region35: #{tpu_custom_call.1} parent=1 // pred_check_branch
      %55 = sbr.rel (0) target = $region37
    $region36: #{tpu_custom_call.1} parent=1 // pred_region
      _
    $region37: #{tpu_custom_call.1} parent=1 // pred_fallthru
      _
    // Predicated region
    $region38: #{tpu_custom_call.1} parent=1 // pred_check
      _
    $region39: #{tpu_custom_call.1} parent=1 // pred_check_branch
      %57 = sbr.rel (0) target = $region41
    $region40: #{tpu_custom_call.1} parent=1 // pred_region
      _
    $region41: #{tpu_custom_call.1} parent=1 // pred_fallthru
      _
    // Predicated region
    $region42: #{tpu_custom_call.1} parent=1 // pred_check
      _
    $region43: #{tpu_custom_call.1} parent=1 // pred_check_branch
      %59 = sbr.rel (0) target = $region45
    $region44: #{tpu_custom_call.1} parent=1 // pred_region
      %60 = dma.done [#allocation6], 256
    $region45: #{tpu_custom_call.1} parent=1 // pred_fallthru
      _
    // Predicated region
    $region46: #{tpu_custom_call.1} parent=1 // pred_check
      _
    $region47: #{tpu_custom_call.1} parent=1 // pred_check_branch
      %62 = sbr.rel (0) target = $region49
    $region48: #{tpu_custom_call.1} parent=1 // pred_region
      %63 = dma.done [#allocation8], 512
    $region49: #{tpu_custom_call.1} parent=1 // pred_fallthru
      _
    %v64 = vld [vmem:[#allocation5] sm:$0xff]
    %v65 = vld [vmem:[#allocation5 + $0x8] sm:$0xff]
    %v66 = vld [vmem:[%s1] sm:$0x1]
    %v68 = vlaneseq
    %v69 = vshrl.u32 %v68, 7
    %v70 = vsub.s32 0, %v69
    %v71 = vrot.slane %v66, %v70
    %v73 = vmul.f32 %v64, %v71
    %v74 = vmul.f32 %v65, %v71
    %vm75 = vcmask 195584
    %v76 = vsel %vm75, %v73, 0.0
    %77 = vadd.xlane.f32.xlu0 %v76
    %v78 = vpop.xlane.xlu0 %77
    %v79 = vsel %vm75, %v74, 0.0
    %80 = vadd.xlane.f32.xlu0 %v79
    %v81 = vpop.xlane.xlu0 %80
    %s82 = sld [smem:[#allocation3]]
    %v83 = vstv %s82
    %v84 = vadd.f32 %v78, %v83
    %v85 = vadd.f32 %v81, %v83
    %v86 = vlaneseq
    %v87 = vshrl.u32 %v86, 7
    %s88 = sld [smem:[#allocation2]]
    %v89 = vstv %s88
    %vm90 = vcmp.lt.s32.totalorder %v87, %v89
    %v93 = vlaneseq
    %v94 = vand.u32 %v93, 127
    %v95 = vlaneseq
    %v96 = vshrl.u32 %v95, 7
    %v97 = vsub.s32 %v94, %v96
    %v98 = vrot.slane %v84, %v97
    %v99 = vlaneseq
    %v100 = vshrl.u32 %v99, 7
    %v101 = vsub.s32 %v94, %v100
    %v102 = vrot.slane %v85, %v101
    %vm103 = vcmask 1041409
    %v104 = vsel %vm103, %v102, %v98
    %v106 = vsel %vm90, %v104, 0.0
    %v107 = vld [vmem:[#allocation7] sm:$0xff]
    %v108 = vld [vmem:[#allocation7 + $0x8] sm:$0xff]
    %v109 = vld [vmem:[#allocation7 + $0x10] sm:$0xff]
    %v110 = vld [vmem:[#allocation7 + $0x18] sm:$0xff]
    %v111 = vld [vmem:[%s3] sm:$0xf]
    %v113 = vlaneseq
    %v114 = vshrl.u32 %v113, 7
    %v115 = vsub.s32 0, %v114
    %v116 = vrot.slane %v111, %v115
    %v117 = vlaneseq
    %v118 = vshrl.u32 %v117, 7
    %v119 = vsub.s32 1, %v118
    %v120 = vrot.slane %v111, %v119
    %v121 = vlaneseq
    %v122 = vshrl.u32 %v121, 7
    %v123 = vsub.s32 2, %v122
    %v124 = vrot.slane %v111, %v123
    %v125 = vlaneseq
    %v126 = vshrl.u32 %v125, 7
    %v127 = vsub.s32 3, %v126
    %v128 = vrot.slane %v111, %v127
    %vm133 = vcmask 64512
    %v135 = vsel %vm133, %v106, 0
    %137 = vmatprep.subr.mxu0 %v108
    %138 = vmatpush1.msra.mxu0 %v107
    %139 = vmatprep.subr.mxu0 0.0
    %140 = vmatpush1.msra.mxu0 0.0
    %141 = vmatprep.subr.mxu0 0.0
    %142 = vmatpush1.msra.mxu0 0.0
    %143 = vmatprep.subr.mxu0 0.0
    %144 = vmatpush1.msra.mxu0 0.0
    %145 = vmatprep.subr.mxu0 0.0
    %146 = vmatpush1.msra.mxu0 0.0
    %147 = vmatprep.subr.mxu0 0.0
    %148 = vmatpush1.msra.mxu0 0.0
    %149 = vmatprep.subr.mxu0 0.0
    %150 = vmatpush1.msra.mxu0 0.0
    %151 = vmatprep.subr.mxu0 0.0
    %152 = vmatpush1.msra.mxu0 0.0
    %153 = vmatprep.subr.mxu0 0.0
    %154 = vmatpush1.msra.mxu0 0.0
    %155 = vmatprep.subr.mxu0 0.0
    %156 = vmatpush1.msra.mxu0 0.0
    %157 = vmatprep.subr.mxu0 0.0
    %158 = vmatpush1.msra.mxu0 0.0
    %159 = vmatprep.subr.mxu0 0.0
    %160 = vmatpush1.msra.mxu0 0.0
    %161 = vmatprep.subr.mxu0 0.0
    %162 = vmatpush1.msra.mxu0 0.0
    %163 = vmatprep.subr.mxu0 0.0
    %164 = vmatpush1.msra.mxu0 0.0
    %165 = vmatprep.subr.mxu0 0.0
    %166 = vmatpush1.msra.mxu0 0.0
    %167 = vmatprep.subr.mxu0 0.0
    %168 = vmatpush1.msra.mxu0 0.0
    %169 = vmatprep.subr.mxu0 0.0
    %170 = vmatpush1.msra.mxu0 0.0
    %171 = vmatprep.subr.mxu0 0.0
    %172 = vmatpush1.msra.mxu0 0.0
    %173 = vmatprep.subr.mxu0 0.0
    %174 = vmatpush1.msra.mxu0 0.0
    %175 = vmatprep.subr.mxu0 0.0
    %176 = vmatpush1.msra.mxu0 0.0
    %177 = vmatprep.subr.mxu0 0.0
    %178 = vmatpush1.msra.mxu0 0.0
    %179 = vmatprep.subr.mxu0 0.0
    %180 = vmatpush1.msra.mxu0 0.0
    %181 = vmatprep.subr.mxu0 0.0
    %182 = vmatpush1.msra.mxu0 0.0
    %183 = vmatprep.subr.mxu0 0.0
    %184 = vmatpush1.msra.mxu0 0.0
    %185 = vmatprep.subr.mxu0 0.0
    %186 = vmatpush1.msra.mxu0 0.0
    %187 = vmatprep.subr.mxu0 0.0
    %188 = vmatpush1.msra.mxu0 0.0
    %189 = vmatprep.subr.mxu0 0.0
    %190 = vmatpush1.msra.mxu0 0.0
    %191 = vmatprep.subr.mxu0 0.0
    %192 = vmatpush1.msra.mxu0 0.0
    %193 = vmatprep.subr.mxu0 0.0
    %194 = vmatpush1.msra.mxu0 0.0
    %195 = vmatprep.subr.mxu0 0.0
    %196 = vmatpush1.msra.mxu0 0.0
    %197 = vmatprep.subr.mxu0 0.0
    %198 = vmatpush1.msra.mxu0 0.0
    %199 = vmatprep.subr.mxu0 0.0
    %200 = vmatpush1.msra.mxu0 0.0
    %201 = vmatprep.mubr.f32.mxu0 0.0
    %202 = vmatmul.mubr.f32.gmra.mrb[0].mxu0 %v135
    %v203 = vpop.f32.mrb[0].mxu0
    %v204 = vadd.f32 %v116, %v203
    %v205 = vpop.f32.mrb[0].mxu0
    %v206 = vadd.f32 %v120, %v205
    %207 = vdwg.mxu0
    %208 = vmatprep.subr.mxu0 %v110
    %209 = vmatpush1.msra.mxu0 %v109
    %210 = vmatprep.subr.mxu0 0.0
    %211 = vmatpush1.msra.mxu0 0.0
    %212 = vmatprep.subr.mxu0 0.0
    %213 = vmatpush1.msra.mxu0 0.0
    %214 = vmatprep.subr.mxu0 0.0
    %215 = vmatpush1.msra.mxu0 0.0
    %216 = vmatprep.subr.mxu0 0.0
    %217 = vmatpush1.msra.mxu0 0.0
    %218 = vmatprep.subr.mxu0 0.0
    %219 = vmatpush1.msra.mxu0 0.0
    %220 = vmatprep.subr.mxu0 0.0
    %221 = vmatpush1.msra.mxu0 0.0
    %222 = vmatprep.subr.mxu0 0.0
    %223 = vmatpush1.msra.mxu0 0.0
    %224 = vmatprep.subr.mxu0 0.0
    %225 = vmatpush1.msra.mxu0 0.0
    %226 = vmatprep.subr.mxu0 0.0
    %227 = vmatpush1.msra.mxu0 0.0
    %228 = vmatprep.subr.mxu0 0.0
    %229 = vmatpush1.msra.mxu0 0.0
    %230 = vmatprep.subr.mxu0 0.0
    %231 = vmatpush1.msra.mxu0 0.0
    %232 = vmatprep.subr.mxu0 0.0
    %233 = vmatpush1.msra.mxu0 0.0
    %234 = vmatprep.subr.mxu0 0.0
    %235 = vmatpush1.msra.mxu0 0.0
    %236 = vmatprep.subr.mxu0 0.0
    %237 = vmatpush1.msra.mxu0 0.0
    %238 = vmatprep.subr.mxu0 0.0
    %239 = vmatpush1.msra.mxu0 0.0
    %240 = vmatprep.subr.mxu0 0.0
    %241 = vmatpush1.msra.mxu0 0.0
    %242 = vmatprep.subr.mxu0 0.0
    %243 = vmatpush1.msra.mxu0 0.0
    %244 = vmatprep.subr.mxu0 0.0
    %245 = vmatpush1.msra.mxu0 0.0
    %246 = vmatprep.subr.mxu0 0.0
    %247 = vmatpush1.msra.mxu0 0.0
    %248 = vmatprep.subr.mxu0 0.0
    %249 = vmatpush1.msra.mxu0 0.0
    %250 = vmatprep.subr.mxu0 0.0
    %251 = vmatpush1.msra.mxu0 0.0
    %252 = vmatprep.subr.mxu0 0.0
    %253 = vmatpush1.msra.mxu0 0.0
    %254 = vmatprep.subr.mxu0 0.0
    %255 = vmatpush1.msra.mxu0 0.0
    %256 = vmatprep.subr.mxu0 0.0
    %257 = vmatpush1.msra.mxu0 0.0
    %258 = vmatprep.subr.mxu0 0.0
    %259 = vmatpush1.msra.mxu0 0.0
    %260 = vmatprep.subr.mxu0 0.0
    %261 = vmatpush1.msra.mxu0 0.0
    %262 = vmatprep.subr.mxu0 0.0
    %263 = vmatpush1.msra.mxu0 0.0
    %264 = vmatprep.subr.mxu0 0.0
    %265 = vmatpush1.msra.mxu0 0.0
    %266 = vmatprep.subr.mxu0 0.0
    %267 = vmatpush1.msra.mxu0 0.0
    %268 = vmatprep.subr.mxu0 0.0
    %269 = vmatpush1.msra.mxu0 0.0
    %270 = vmatprep.subr.mxu0 0.0
    %271 = vmatpush1.msra.mxu0 0.0
    %272 = vmatprep.mubr.f32.mxu0 0.0
    %273 = vmatmul.mubr.f32.gmra.mrb[0].mxu0 %v135
    %v274 = vpop.f32.mrb[0].mxu0
    %v275 = vadd.f32 %v124, %v274
    %v276 = vpop.f32.mrb[0].mxu0
    %v277 = vadd.f32 %v128, %v276
    %278 = vdwg.mxu0
    %vm279 = vcmask 1041408
    %v280 = vsel %vm279, %v204, 0.0
    %v281 = vrot.slane %v280, 4
    %v282 = vadd.f32 %v280, %v281
    %v283 = vrot.slane %v282, 2
    %v284 = vadd.f32 %v282, %v283
    %v285 = vrot.slane %v284, 1
    %v286 = vadd.f32 %v284, %v285
    %v287 = vsel %vm279, %v206, 0.0
    %v288 = vrot.slane %v287, 4
    %v289 = vadd.f32 %v287, %v288
    %v290 = vrot.slane %v289, 2
    %v291 = vadd.f32 %v289, %v290
    %v292 = vrot.slane %v291, 1
    %v293 = vadd.f32 %v291, %v292
    %v294 = vsel %vm279, %v275, 0.0
    %v295 = vrot.slane %v294, 4
    %v296 = vadd.f32 %v294, %v295
    %v297 = vrot.slane %v296, 2
    %v298 = vadd.f32 %v296, %v297
    %v299 = vrot.slane %v298, 1
    %v300 = vadd.f32 %v298, %v299
    %v301 = vsel %vm279, %v277, 0.0
    %v302 = vrot.slane %v301, 4
    %v303 = vadd.f32 %v301, %v302
    %v304 = vrot.slane %v303, 2
    %v305 = vadd.f32 %v303, %v304
    %v306 = vrot.slane %v305, 1
    %v307 = vadd.f32 %v305, %v306
    %v308 = vmul.f32 %v286, 0.5
    %v309 = vmul.f32 %v293, 0.5
    %v310 = vmul.f32 %v300, 0.5
    %v311 = vmul.f32 %v307, 0.5
    %v312 = vmul.f32 %v204, %v204
    %v313 = vmul.f32 %v206, %v206
    %v314 = vmul.f32 %v275, %v275
    %v315 = vmul.f32 %v277, %v277
    %v316 = vsel %vm279, %v312, 0.0
    %v317 = vrot.slane %v316, 4
    %v318 = vadd.f32 %v316, %v317
    %v319 = vrot.slane %v318, 2
    %v320 = vadd.f32 %v318, %v319
    %v321 = vrot.slane %v320, 1
    %v322 = vadd.f32 %v320, %v321
    %v323 = vsel %vm279, %v313, 0.0
    %v324 = vrot.slane %v323, 4
    %v325 = vadd.f32 %v323, %v324
    %v326 = vrot.slane %v325, 2
    %v327 = vadd.f32 %v325, %v326
    %v328 = vrot.slane %v327, 1
    %v329 = vadd.f32 %v327, %v328
    %v330 = vsel %vm279, %v314, 0.0
    %v331 = vrot.slane %v330, 4
    %v332 = vadd.f32 %v330, %v331
    %v333 = vrot.slane %v332, 2
    %v334 = vadd.f32 %v332, %v333
    %v335 = vrot.slane %v334, 1
    %v336 = vadd.f32 %v334, %v335
    %v337 = vsel %vm279, %v315, 0.0
    %v338 = vrot.slane %v337, 4
    %v339 = vadd.f32 %v337, %v338
    %v340 = vrot.slane %v339, 2
    %v341 = vadd.f32 %v339, %v340
    %v342 = vrot.slane %v341, 1
    %v343 = vadd.f32 %v341, %v342
    %v344 = vmul.f32 %v322, 0.5
    %v345 = vmul.f32 %v329, 0.5
    %v346 = vmul.f32 %v336, 0.5
    %v347 = vmul.f32 %v343, 0.5
    %v348 = vmul.f32 %v308, %v308
    %v349 = vmul.f32 %v309, %v309
    %v350 = vmul.f32 %v310, %v310
    %v351 = vmul.f32 %v311, %v311
    %v352 = vsub.f32 %v344, %v348
    %v353 = vsub.f32 %v345, %v349
    %v354 = vsub.f32 %v346, %v350
    %v355 = vsub.f32 %v347, %v351
    %v356 = vadd.f32 %v352, 1e-05
    %v357 = vadd.f32 %v353, 1e-05
    %v358 = vadd.f32 %v354, 1e-05
    %v359 = vadd.f32 %v355, 1e-05
    %v360 = vrsqrt.pop %v356
    %v361 = vrsqrt.pop %v357
    %v362 = vrsqrt.pop %v358
    %v363 = vrsqrt.pop %v359
    %v364 = vld [vmem:[%s4] sm:$0xf]
    %v366 = vlaneseq
    %v367 = vshrl.u32 %v366, 7
    %v368 = vsub.s32 0, %v367
    %v369 = vrot.slane %v364, %v368
    %v370 = vlaneseq
    %v371 = vshrl.u32 %v370, 7
    %v372 = vsub.s32 1, %v371
    %v373 = vrot.slane %v364, %v372
    %v374 = vlaneseq
    %v375 = vshrl.u32 %v374, 7
    %v376 = vsub.s32 2, %v375
    %v377 = vrot.slane %v364, %v376
    %v378 = vlaneseq
    %v379 = vshrl.u32 %v378, 7
    %v380 = vsub.s32 3, %v379
    %v381 = vrot.slane %v364, %v380
    %v386 = vmul.f32 %v360, %v369
    %v387 = vmul.f32 %v361, %v373
    %v388 = vmul.f32 %v362, %v377
    %v389 = vmul.f32 %v363, %v381
    %v390 = vld [vmem:[%s5] sm:$0xf]
    %v391 = vmul.f32 %v308, %v386
    %v392 = vmul.f32 %v309, %v387
    %v393 = vmul.f32 %v310, %v388
    %v394 = vmul.f32 %v311, %v389
    %v399 = vcombine.low %v391, %v392
    %v400 = vcombine.low %v393, %v394
    %v402 = vunpack.c.l.s4 1966171168
    %v403 = vunpack.c.0.s8 %v402
    %v404 = vlaneseq
    %v405 = vshrl.u32 %v404, 7
    %v406 = vsub.s32 %v403, %v405
    %v407 = vrot.slane %v399, %v406
    %v409 = vunpack.c.l.s4 1966171168
    %v410 = vunpack.c.0.s8 %v409
    %v411 = vlaneseq
    %v412 = vshrl.u32 %v411, 7
    %v413 = vsub.s32 %v410, %v412
    %v414 = vrot.slane %v400, %v413
    %v415 = vcombine.low %v407, %v414
    %v417 = vunpack.c.l.s4 1966171168
    %v418 = vunpack.c.0.s8 %v417
    %v419 = vlaneseq
    %v420 = vshrl.u32 %v419, 7
    %v421 = vsub.s32 %v418, %v420
    %v422 = vrot.slane %v415, %v421
    %v424 = vsub.f32 %v390, %v422
    %v425 = vlaneseq
    %v426 = vshrl.u32 %v425, 7
    %v427 = vsub.s32 0, %v426
    %v428 = vrot.slane %v386, %v427
    %v429 = vlaneseq
    %v430 = vshrl.u32 %v429, 7
    %v431 = vsub.s32 0, %v430
    %v432 = vrot.slane %v387, %v431
    %v433 = vlaneseq
    %v434 = vshrl.u32 %v433, 7
    %v435 = vsub.s32 0, %v434
    %v436 = vrot.slane %v388, %v435
    %v437 = vlaneseq
    %v438 = vshrl.u32 %v437, 7
    %v439 = vsub.s32 0, %v438
    %v440 = vrot.slane %v389, %v439
    %v441 = vmul.f32 %v204, %v428
    %v442 = vmul.f32 %v206, %v432
    %v443 = vmul.f32 %v275, %v436
    %v444 = vmul.f32 %v277, %v440
    %v446 = vlaneseq
    %v447 = vshrl.u32 %v446, 7
    %v448 = vsub.s32 0, %v447
    %v449 = vrot.slane %v424, %v448
    %v450 = vlaneseq
    %v451 = vshrl.u32 %v450, 7
    %v452 = vsub.s32 1, %v451
    %v453 = vrot.slane %v424, %v452
    %v454 = vlaneseq
    %v455 = vshrl.u32 %v454, 7
    %v456 = vsub.s32 2, %v455
    %v457 = vrot.slane %v424, %v456
    %v458 = vlaneseq
    %v459 = vshrl.u32 %v458, 7
    %v460 = vsub.s32 3, %v459
    %v461 = vrot.slane %v424, %v460
    %v466 = vadd.f32 %v441, %v449
    %v467 = vadd.f32 %v442, %v453
    %v468 = vadd.f32 %v443, %v457
    %v469 = vadd.f32 %v444, %v461
    %v470 = vmax.f32 %v466, 0.0
    %v471 = vmax.f32 %v467, 0.0
    %v472 = vmax.f32 %v468, 0.0
    %v473 = vmax.f32 %v469, 0.0
    %v474 = vld [vmem:[%s6] sm:$0xf]
    %v476 = vlaneseq
    %v477 = vshrl.u32 %v476, 7
    %v478 = vsub.s32 0, %v477
    %v479 = vrot.slane %v474, %v478
    %v480 = vlaneseq
    %v481 = vshrl.u32 %v480, 7
    %v482 = vsub.s32 1, %v481
    %v483 = vrot.slane %v474, %v482
    %v484 = vlaneseq
    %v485 = vshrl.u32 %v484, 7
    %v486 = vsub.s32 2, %v485
    %v487 = vrot.slane %v474, %v486
    %v488 = vlaneseq
    %v489 = vshrl.u32 %v488, 7
    %v490 = vsub.s32 3, %v489
    %v491 = vrot.slane %v474, %v490
    %v496 = vmul.f32 %v470, %v479
    %v497 = vmul.f32 %v471, %v483
    %v498 = vmul.f32 %v472, %v487
    %v499 = vmul.f32 %v473, %v491
    %v500 = vsel %vm279, %v496, 0.0
    %v501 = vsel %vm279, %v497, 0.0
    %v502 = vadd.f32 %v500, %v501
    %v503 = vsel %vm279, %v498, 0.0
    %v504 = vadd.f32 %v502, %v503
    %v505 = vsel %vm279, %v499, 0.0
    %v506 = vadd.f32 %v504, %v505
    %507 = vadd.xlane.f32.xlu0 %v506
    %v508 = vpop.xlane.xlu0 %507
    %s509 = sld [smem:[#allocation4]]
    %v510 = vstv %s509
    %v511 = vadd.f32 %v508, %v510
    %v512 = vxor.u32 %v511, 2147483648
    %v513 = vmul.f32 %v512, 1.442695
    %v514 = vpow.pop %v513
    %v515 = vadd.f32 %v514, 1.0
    %v516 = vrcp.pop %v515
    %v517 = vmul.f32 1.0, %v516
    %vm518 = vcmask 1024
    %519 = vst.msk [vmem:[%s10] sm:$0x3] %vm518, %v517
    // Predicated region
    $region50: #{tpu_custom_call.1} parent=1 // pred_check
      _
    $region51: #{tpu_custom_call.1} parent=1 // pred_check_branch
      %521 = sbr.rel (0) target = $region53
    $region52: #{tpu_custom_call.1} parent=1 // pred_region
      _
    $region53: #{tpu_custom_call.1} parent=1 // pred_fallthru
      _
    // Predicated region
    $region54: #{tpu_custom_call.1} parent=1 // pred_check
      _
    $region55: #{tpu_custom_call.1} parent=1 // pred_check_branch
      %523 = sbr.rel (0) target = $region57
    $region56: #{tpu_custom_call.1} parent=1 // pred_region
      _
    $region57: #{tpu_custom_call.1} parent=1 // pred_fallthru
      _
    %524 = vsyncpa [#allocation6], 1
    %525 = vsyncpa [#allocation8], 1

</llo_original>
